<compile_context>
chip_gen: v6e
topology: v6e:2x2x1
jax: 0.10.0
libtpu: 0.0.40
codegen_flags: <defaults>
</compile_context>

<pallas_src>
import functools

import numpy as np
import jax
import jax.numpy as jnp
from jax import lax
from jax.experimental import pallas as pl
from jax.experimental.pallas import tpu as pltpu

# ---------------- module config (mirrors MelSpectrogramFeatures.__init__) ----------------
SAMPLE_RATE = 16000
N_FFT = 64
N_WIN = 64
N_HOP = 16
N_MELS = 16
F_MIN = 0.0
F_MAX = 8000.0
POWER = 1          # magnitude spectrogram (power=2 -> power spectrogram)
CENTER = True
NORMALIZE = False
ONESIDED = True
MEL_NORM = None    # librosa norm=None
MEL_SCALE = "htk"  # htk mel scale
CLIP_VAL = 1e-7

N_FREQ = N_FFT // 2 + 1 if ONESIDED else N_FFT   # 33
FREQ_PAD = 2 * N_FFT                              # 128: [re | im] combined lane axis
MAX_TILE_ROWS = 1024                              # frames per grid step (multiple of 128)
DFT_DTYPE = jnp.bfloat16                          # bf16 MXU operands (f32 accumulation)


# ---------------- deterministic "parameters": librosa-style mel filterbank ----------------
def librosa_mel_fb(sr, n_fft, n_mels, fmin, fmax, htk=True, norm=None):
    """Re-implementation of librosa.filters.mel (returns (n_mels, n_freq))."""
    n_freq = n_fft // 2 + 1
    fftfreqs = np.linspace(0.0, sr / 2.0, n_freq)

    def hz_to_mel(f):
        f = np.asarray(f, dtype=np.float64)
        if htk:
            return 2595.0 * np.log10(1.0 + f / 700.0)
        f_sp = 200.0 / 3
        mels = f / f_sp
        min_log_hz = 1000.0
        min_log_mel = min_log_hz / f_sp
        logstep = np.log(6.4) / 27.0
        return np.where(f >= min_log_hz,
                        min_log_mel + np.log(np.maximum(f, 1e-10) / min_log_hz) / logstep,
                        mels)

    def mel_to_hz(m):
        m = np.asarray(m, dtype=np.float64)
        if htk:
            return 700.0 * (10.0 ** (m / 2595.0) - 1.0)
        f_sp = 200.0 / 3
        freqs = f_sp * m
        min_log_hz = 1000.0
        min_log_mel = min_log_hz / f_sp
        logstep = np.log(6.4) / 27.0
        return np.where(m >= min_log_mel,
                        min_log_hz * np.exp(logstep * (m - min_log_mel)),
                        freqs)

    mel_pts = np.linspace(hz_to_mel(fmin), hz_to_mel(fmax), n_mels + 2)
    mel_f = mel_to_hz(mel_pts)

    fdiff = np.diff(mel_f)
    ramps = mel_f[:, None] - fftfreqs[None, :]
    lower = -ramps[:-2] / fdiff[:-1, None]
    upper = ramps[2:] / fdiff[1:, None]
    weights = np.maximum(0.0, np.minimum(lower, upper))

    if norm == "slaney":
        enorm = 2.0 / (mel_f[2:n_mels + 2] - mel_f[:n_mels])
        weights = weights * enorm[:, None]

    return weights.astype(np.float32)  # (n_mels, n_freq)


# ---------------- host-side constants (Hann window folded into the DFT basis) ----------------
def _build_constants():
    # periodic Hann of length n_win, zero-padded (centered) to n_fft
    n = np.arange(N_WIN)
    hann = 0.5 * (1.0 - np.cos(2.0 * np.pi * n / N_WIN))
    win = np.zeros(N_FFT, dtype=np.float64)
    left = (N_FFT - N_WIN) // 2
    win[left:left + N_WIN] = hann
    if NORMALIZE:
        win = win / np.sqrt(np.sum(win ** 2))

    # combined windowed real-DFT basis:
    #   lanes [0, N_FREQ)            = win * cos(ang)
    #   lanes [N_FFT, N_FFT+N_FREQ)  = win * (-sin(ang))
    #   all remaining lanes exactly zero.
    tt = np.arange(N_FFT)[:, None].astype(np.float64)
    ff = np.arange(N_FREQ)[None, :].astype(np.float64)
    ang = 2.0 * np.pi * tt * ff / N_FFT
    basis = np.zeros((N_FFT, FREQ_PAD), dtype=np.float64)
    basis[:, :N_FREQ] = win[:, None] * np.cos(ang)
    basis[:, N_FFT:N_FFT + N_FREQ] = win[:, None] * (-np.sin(ang))

    # mel filterbank, rows = mels, lanes 0..N_FREQ-1 = weights, lanes N_FREQ..N_FFT-1 zero
    fb = librosa_mel_fb(SAMPLE_RATE, N_FFT, N_MELS, F_MIN, F_MAX,
                        htk=(MEL_SCALE == "htk"), norm=MEL_NORM)       # (n_mels, n_freq)
    fbt = np.zeros((N_MELS, N_FFT), dtype=np.float64)
    fbt[:, :N_FREQ] = fb

    return jnp.asarray(basis, DFT_DTYPE), jnp.asarray(fbt, jnp.float32)


# ---------------- Pallas kernel: windowed real DFT -> power -> mel -> safe_log ----------------
def mel_spec_kernel(frames_ref, basis_ref, fbt_ref, out_ref, *, power, clip_val):
    # frames_ref: (1, tile_rows, N_FFT)   bf16 pre-framed, window-ready audio frames
    # basis_ref:  (N_FFT, 128)            bf16 window-folded [cos | -sin] basis
    # fbt_ref:    (N_MELS, N_FFT)         f32 zero-padded mel filterbank (rows = mels)
    # out_ref:    (1, N_MELS, tile_rows)  transposed, lane-dense output tile
    f = frames_ref[0]                                                  # (tile_rows, 64)

    # single K=64 DFT matmul, [re | im] packed on the 128-lane axis, f32 accumulation
    r = jnp.dot(f, basis_ref[...], preferred_element_type=jnp.float32)  # (tile_rows, 128)

    re = r[:, :N_FFT]                                                  # (tile_rows, 64)
    im = r[:, N_FFT:]                                                  # (tile_rows, 64)
    pw = re * re + im * im                                             # re^2 + im^2 (lanes >= N_FREQ are 0)

    if power == 2:
        spec = pw
    elif power == 1:
        spec = jnp.sqrt(pw)
    else:
        spec = jnp.power(pw, power / 2.0)

    # (N_MELS, 64) x (tile_rows, 64)^T -> (N_MELS, tile_rows): lane-dense transposed mel
    mel_t = lax.dot_general(fbt_ref[...], spec, (((1,), (1,)), ((), ())),
                            preferred_element_type=jnp.float32)
    out_ref[0] = jnp.log(jnp.maximum(mel_t, clip_val))                 # safe_log


# ---------------- wrapper ----------------
def mel_spectrogram_features(x):
    """x: (B, T) float32 audio -> (B, n_mels, n_frames) float32 log-mel features."""
    x = jnp.asarray(x, jnp.float32)
    B, T = x.shape

    # --- center reflect padding (mirrors torch.stft center=True) ---
    if CENTER:
        pad = N_FFT // 2
        assert T > pad, "reflect padding requires T > n_fft // 2"
        xp = jnp.pad(x, ((0, 0), (pad, pad)), mode="reflect")
    else:
        xp = x
    t_padded = xp.shape[1]
    n_frames = 1 + (t_padded - N_FFT) // N_HOP

    # --- frame-row tiling: multiple of 128 (lane-dense output), large tiles ---
    def round_up(v, m):
        return ((v + m - 1) // m) * m

    tile_rows = max(128, min(MAX_TILE_ROWS, round_up(n_frames, 128)))
    if B == 1 and n_frames > 128:
        # keep >= 2 grid steps so both v7x TensorCores get work
        half = round_up(-(-n_frames // 2), 128)
        tile_rows = min(tile_rows, max(128, half))
    n_tiles = -(-n_frames // tile_rows)
    n_frames_pad = n_tiles * tile_rows

    # --- host-side framing: (B, n_frames_pad, n_fft); padded frames are all-zero ---
    need = (n_frames_pad - 1) * N_HOP + N_FFT
    xp = jnp.pad(xp, ((0, 0), (0, max(0, need - t_padded))))
    frame_idx = (np.arange(n_frames_pad)[:, None] * N_HOP
                 + np.arange(N_FFT)[None, :])                          # (n_frames_pad, 64)
    frames = xp[:, frame_idx].astype(DFT_DTYPE)                        # (B, n_frames_pad, 64)

    basis, fbt = _build_constants()

    kernel = functools.partial(mel_spec_kernel, power=POWER, clip_val=CLIP_VAL)

    rows_total = B * n_frames_pad
    cost = pl.CostEstimate(
        flops=rows_total * (2 * N_FFT * FREQ_PAD + 2 * N_FFT * N_MELS),
        transcendentals=rows_total * (N_FFT + N_MELS),
        bytes_accessed=int(frames.size) * 2 + B * N_MELS * n_frames_pad * 4
                       + int(basis.size) * 2 + int(fbt.size) * 4,
    )

    out = pl.pallas_call(
        kernel,
        out_shape=jax.ShapeDtypeStruct((B, N_MELS, n_frames_pad), jnp.float32),
        grid_spec=pltpu.PrefetchScalarGridSpec(
            num_scalar_prefetch=0,
            grid=(B, n_tiles),
            in_specs=[
                pl.BlockSpec((1, tile_rows, N_FFT), lambda b, r: (b, r, 0)),
                pl.BlockSpec((N_FFT, FREQ_PAD), lambda b, r: (0, 0)),
                pl.BlockSpec((N_MELS, N_FFT), lambda b, r: (0, 0)),
            ],
            out_specs=pl.BlockSpec((1, N_MELS, tile_rows), lambda b, r: (b, 0, r)),
        ),
        compiler_params=pltpu.CompilerParams(
            dimension_semantics=("parallel", "parallel")),
        cost_estimate=cost,
    )(frames, basis, fbt)

    # TODO(synk): for many short utterances (huge B, tiny n_frames) flatten (B, n_frames_pad)
    # into a single frame axis so each grid step still processes >= 1024 frame-rows.

    # drop padded frames; output already in PyTorch (B, C, L) layout
    return out[:, :, :n_frames]


if __name__ == "__main__":
    key = jax.random.PRNGKey(0)
    B, T = 2, 256
    audio = jax.random.normal(key, (B, T), dtype=jnp.float32)

    mel = mel_spectrogram_features(audio)
    mel = jax.block_until_ready(mel)

    n_frames_expected = 1 + ((T + 2 * (N_FFT // 2)) - N_FFT) // N_HOP if CENTER \
        else 1 + (T - N_FFT) // N_HOP
    assert mel.shape == (B, N_MELS, n_frames_expected), mel.shape
    assert bool(jnp.all(jnp.isfinite(mel)))
    print("KERNEL_OK")
</pallas_src>

<mosaic_0001>
module attributes {stable_mosaic.version = 11 : i64} {
  func.func @mel_spec_kernel(%arg0: i32, %arg1: i32, %arg2: memref<1x128x64xbf16, #tpu.memory_space<vmem>>, %arg3: memref<64x128xbf16, #tpu.memory_space<vmem>>, %arg4: memref<16x64xf32, #tpu.memory_space<vmem>>, %arg5: memref<1x16x128xf32, #tpu.memory_space<vmem>>) attributes {dimension_semantics = [#tpu.dimension_semantics<parallel>, #tpu.dimension_semantics<parallel>], iteration_bounds = array<i64: 2, 1>, scalar_prefetch = 0 : i64, scratch_operands = 0 : i64, tpu.core_type = #tpu.core_type<tc>, window_params = [{transform_indices = @transform_0, window_bounds = array<i64: 1, 128, 64>}, {pipeline_mode = #tpu.pipeline_mode<synchronous>, transform_indices = @transform_1, window_bounds = array<i64: 64, 128>}, {pipeline_mode = #tpu.pipeline_mode<synchronous>, transform_indices = @transform_2, window_bounds = array<i64: 16, 64>}, {transform_indices = @transform_3, window_bounds = array<i64: 1, 16, 128>}]} {
    %c0 = arith.constant 0 : index
    %c0_0 = arith.constant 0 : index
    %c0_1 = arith.constant 0 : index
    %0 = vector.load %arg2[%c0, %c0_0, %c0_1] : memref<1x128x64xbf16, #tpu.memory_space<vmem>>, vector<1x128x64xbf16>
    %1 = vector.shape_cast %0 : vector<1x128x64xbf16> to vector<128x64xbf16>
    %c0_2 = arith.constant 0 : index
    %c0_3 = arith.constant 0 : index
    %2 = vector.load %arg3[%c0_2, %c0_3] : memref<64x128xbf16, #tpu.memory_space<vmem>>, vector<64x128xbf16>
    %cst = arith.constant dense<0.000000e+00> : vector<128x128xf32>
    %3 = tpu.matmul %1, %2, %cst {dimension_numbers = #tpu.dot_dimension_numbers<[1], [0], [0], [1], [0, 0, 1, 1], [], []>} : vector<128x64xbf16>, vector<64x128xbf16>, vector<128x128xf32> -> vector<128x128xf32>
    %4 = vector.extract_strided_slice %3 {offsets = [0, 0], sizes = [128, 64], strides = [1, 1]} : vector<128x128xf32> to vector<128x64xf32>
    %5 = vector.extract_strided_slice %3 {offsets = [0, 64], sizes = [128, 64], strides = [1, 1]} : vector<128x128xf32> to vector<128x64xf32>
    %6 = arith.mulf %4, %4 : vector<128x64xf32>
    %7 = arith.mulf %5, %5 : vector<128x64xf32>
    %8 = arith.addf %6, %7 : vector<128x64xf32>
    %9 = math.sqrt %8 : vector<128x64xf32>
    %c0_4 = arith.constant 0 : index
    %c0_5 = arith.constant 0 : index
    %10 = vector.load %arg4[%c0_4, %c0_5] : memref<16x64xf32, #tpu.memory_space<vmem>>, vector<16x64xf32>
    %cst_6 = arith.constant dense<0.000000e+00> : vector<16x128xf32>
    %11 = tpu.matmul %10, %9, %cst_6 {dimension_numbers = #tpu.dot_dimension_numbers<[1], [1], [0], [0], [0, 0, 1, 0], [], []>} : vector<16x64xf32>, vector<128x64xf32>, vector<16x128xf32> -> vector<16x128xf32>
    %cst_7 = arith.constant 1.000000e-07 : f32
    %12 = vector.broadcast %cst_7 : f32 to vector<16x128xf32>
    %13 = arith.maximumf %11, %12 : vector<16x128xf32>
    %14 = math.log %13 : vector<16x128xf32>
    %c0_8 = arith.constant 0 : index
    %c0_9 = arith.constant 0 : index
    %c0_10 = arith.constant 0 : index
    %15 = vector.load %arg5[%c0_8, %c0_9, %c0_10] : memref<1x16x128xf32, #tpu.memory_space<vmem>>, vector<1x16x128xf32>
    %16 = vector.shape_cast %15 : vector<1x16x128xf32> to vector<16x128xf32>
    %17 = vector.shape_cast %14 : vector<16x128xf32> to vector<1x16x128xf32>
    tpu.vector_store %arg5[%c0_8, %c0_9, %c0_10], %17 {strides = array<i32>} : memref<1x16x128xf32, #tpu.memory_space<vmem>>, vector<1x16x128xf32>,
    return
  }
  func.func @transform_0(%arg0: i32, %arg1: i32) -> (i32, i32, i32) {
    %c0_i32 = arith.constant 0 : i32
    %c0_i32_0 = arith.constant 0 : i32
    return %arg0, %arg1, %c0_i32 : i32, i32, i32
  }
  func.func @transform_1(%arg0: i32, %arg1: i32) -> (i32, i32) {
    %c0_i32 = arith.constant 0 : i32
    %c0_i32_0 = arith.constant 0 : i32
    %c0_i32_1 = arith.constant 0 : i32
    return %c0_i32, %c0_i32_0 : i32, i32
  }
  func.func @transform_2(%arg0: i32, %arg1: i32) -> (i32, i32) {
    %c0_i32 = arith.constant 0 : i32
    %c0_i32_0 = arith.constant 0 : i32
    %c0_i32_1 = arith.constant 0 : i32
    return %c0_i32, %c0_i32_0 : i32, i32
  }
  func.func @transform_3(%arg0: i32, %arg1: i32) -> (i32, i32, i32) {
    %c0_i32 = arith.constant 0 : i32
    %c0_i32_0 = arith.constant 0 : i32
    return %arg0, %c0_i32, %arg1 : i32, i32, i32
  }
}

</mosaic_0001>

<llo_original>
// kernel: tpu_custom_call.1
$region0: #{tpu_custom_call.1}
  #allocation0 [shape = 'u32[]', space=smem, size = 0x4, offset = 0x4, fixed_abs, tag = 'smem constant byte address 0x4 - core index']
  #allocation1 [shape = 'u32[144,128]{1,0:T(1,128)}', space=vmem, size = 0x12000, scoped, tag = 'internal scratch']
  %s0 = inlined_call_operand.vmem [shape: bf16[2,128,64], index: 0, kind: input, shape index: {}]
  %s1 = inlined_call_operand.vmem [shape: bf16[64,128], index: 1, kind: input, shape index: {}]
  %s2 = inlined_call_operand.vmem [shape: f32[16,64], index: 2, kind: input, shape index: {}]
  %s3 = inlined_call_operand.hbm [shape: f32[2,16,128], index: 3, kind: output, shape index: {}]
  %s4 = sld [smem:[#allocation0]]
  $region45: #{tpu_custom_call.1} parent=0
    _
  %s6 = ssub.s32 1, %s4
  %s7 = scalar_select 0, %s6, %s4
  $region1: #{tpu_custom_call.1} parent=0
    #allocation2 [shape = 'u8[16384]{0}', space=vmem, size = 0x4000, scoped, tag = 'output window, operand 0']
    #allocation3 [shape = 's32[2]{0}', space=sflag, size = 0x8, scoped, tag = 'scoped memory for tpu_custom_call.1']
    %8 = vsyncpa [#allocation3], 0
    %s9 = scalar_lea.sflag [#allocation3], 1
    %10 = vsyncpa %s9, 0
    loop: start=0, step=1, limit=4
    $region2: #{tpu_custom_call.1} parent=1 // loop_pre_header
      _
    $region3: #{tpu_custom_call.1} parent=1 // loop_header
      %s12 = sphi 0, %s16
      %p13 = scmp.ge.s32.totalorder %s12, 4
      %s19 = sphi 0, %s31
      %s20 = sphi 0, %s27
      %s21 = sphi 0, %s19
      %s22 = sphi 0, %s20
      %s23 = sphi 0, %s21
      %s24 = sphi 0, %s22
      %s36 = sphi 0, %s38
      %s39 = sphi 0, %s36
      %s40 = sphi 0, %s39
      %s56 = sphi 0, %s40
      %s60 = sphi 0, %s60
      %s62 = sphi 0, %s60
      %s63 = sphi 0, %s62
      %s77 = sphi 0, %s63
      %s81 = sphi 0, %s81
      %s83 = sphi 0, %s81
      %s84 = sphi 0, %s83
      %s98 = sphi 0, %s84
      %s106 = sphi 0, %s108
      %s109 = sphi 0, %s106
      %s110 = sphi 0, %s109
      %s126 = sphi 0, %s110
    $region4: #{tpu_custom_call.1} parent=1 // loop_header_branch
      %15 = sbr.rel (%p13) target = $region8
    $region5: #{tpu_custom_call.1} parent=1 // loop_body
      %s17 = ssub.s32 %s12, 1
      %s18 = ssub.s32 %s12, 2
      %s25 = sadd.s32 1, %s20
      %p26 = scmp.ge.s32.totalorder %s25, 1
      %s27 = scalar_select %p26, 0, %s25
      %s28 = sadd.s32 1, %s19
      %s29 = scalar_select %p26, %s28, %s19
      %p30 = scmp.ge.s32.totalorder %s29, 2
      %s31 = scalar_select %p30, 0, %s29
      %s32 = ssub.s32 %s19, %s31
      %s33 = ssub.s32 %s20, %s27
      %s34 = sor.u32 %s32, %s33
      %p35 = scmp.eq.s32.totalorder %s34, 0
      %s37 = sadd.s32 %s36, 1
      %s38 = scalar_select %p35, %s36, %s37
      %p41 = pneg %p35
      %p42 = scmp.eq.s32.totalorder %s12, 1
      %p43 = por %p41, %p42
      %p44 = scmp.ne.s32.totalorder %s36, %s39
      %p45 = scmp.eq.s32.totalorder %s12, 0
      %p46 = por %p44, %p45
      %p47 = scmp.ne.s32.totalorder %s36, %s39
      %p48 = scmp.eq.s32.totalorder %s17, 1
      %p49 = por %p47, %p48
      %p50 = scmp.ne.s32.totalorder %s39, %s40
      %p51 = scmp.eq.s32.totalorder %s17, 0
      %p52 = por %p50, %p51
      %p53 = scmp.ne.s32.totalorder %s39, %s40
      %p54 = scmp.eq.s32.totalorder %s18, 1
      %p55 = por %p53, %p54
      %p57 = scmp.ne.s32.totalorder %s40, %s56
      %p58 = scmp.eq.s32.totalorder %s18, 0
      %p59 = por %p57, %p58
      %s61 = sadd.s32 %s60, 1
      %p64 = scmp.eq.s32.totalorder %s12, 1
      %p65 = scmp.ne.s32.totalorder %s60, %s62
      %p66 = scmp.eq.s32.totalorder %s12, 0
      %p67 = por %p65, %p66
      %p68 = scmp.ne.s32.totalorder %s60, %s62
      %p69 = scmp.eq.s32.totalorder %s17, 1
      %p70 = por %p68, %p69
      %p71 = scmp.ne.s32.totalorder %s62, %s63
      %p72 = scmp.eq.s32.totalorder %s17, 0
      %p73 = por %p71, %p72
      %p74 = scmp.ne.s32.totalorder %s62, %s63
      %p75 = scmp.eq.s32.totalorder %s18, 1
      %p76 = por %p74, %p75
      %p78 = scmp.ne.s32.totalorder %s63, %s77
      %p79 = scmp.eq.s32.totalorder %s18, 0
      %p80 = por %p78, %p79
      %s82 = sadd.s32 %s81, 1
      %p85 = scmp.eq.s32.totalorder %s12, 1
      %p86 = scmp.ne.s32.totalorder %s81, %s83
      %p87 = scmp.eq.s32.totalorder %s12, 0
      %p88 = por %p86, %p87
      %p89 = scmp.ne.s32.totalorder %s81, %s83
      %p90 = scmp.eq.s32.totalorder %s17, 1
      %p91 = por %p89, %p90
      %p92 = scmp.ne.s32.totalorder %s83, %s84
      %p93 = scmp.eq.s32.totalorder %s17, 0
      %p94 = por %p92, %p93
      %p95 = scmp.ne.s32.totalorder %s83, %s84
      %p96 = scmp.eq.s32.totalorder %s18, 1
      %p97 = por %p95, %p96
      %p99 = scmp.ne.s32.totalorder %s84, %s98
      %p100 = scmp.eq.s32.totalorder %s18, 0
      %p101 = por %p99, %p100
      %s102 = ssub.s32 %s19, %s31
      %s103 = ssub.s32 %s20, %s27
      %s104 = sor.u32 %s102, %s103
      %p105 = scmp.eq.s32.totalorder %s104, 0
      %s107 = sadd.s32 %s106, 1
      %s108 = scalar_select %p105, %s106, %s107
      %p111 = pneg %p105
      %p112 = scmp.eq.s32.totalorder %s12, 1
      %p113 = por %p111, %p112
      %p114 = scmp.ne.s32.totalorder %s106, %s109
      %p115 = scmp.eq.s32.totalorder %s12, 0
      %p116 = por %p114, %p115
      %p117 = scmp.ne.s32.totalorder %s106, %s109
      %p118 = scmp.eq.s32.totalorder %s17, 1
      %p119 = por %p117, %p118
      %p120 = scmp.ne.s32.totalorder %s109, %s110
      %p121 = scmp.eq.s32.totalorder %s17, 0
      %p122 = por %p120, %p121
      %p123 = scmp.ne.s32.totalorder %s109, %s110
      %p124 = scmp.eq.s32.totalorder %s18, 1
      %p125 = por %p123, %p124
      %p127 = scmp.ne.s32.totalorder %s110, %s126
      %p128 = scmp.eq.s32.totalorder %s18, 0
      %p129 = por %p127, %p128
      %p130 = scmp.le.s32.totalorder 1, %s12
      %p131 = scmp.lt.s32.totalorder %s12, 3
      %p132 = pnand %p130, %p131
      %p133 = pneg %p132
      // Predicated region
      $region9: #{tpu_custom_call.1} parent=5 // pred_check
        _
      $region10: #{tpu_custom_call.1} parent=5 // pred_check_branch
        %135 = sbr.rel (%p132) target = $region12
      $region11: #{tpu_custom_call.1} parent=5 // pred_region
        %s136 = ssub.s32 %s12, 1
        // Predicated region
        $region13: #{tpu_custom_call.1} parent=11 // pred_check
          %p137 = pneg %p73
        $region14: #{tpu_custom_call.1} parent=11 // pred_check_branch
          %139 = sbr.rel (%p137) target = $region16
        $region15: #{tpu_custom_call.1} parent=11 // pred_region
          _
        $region16: #{tpu_custom_call.1} parent=11 // pred_fallthru
          _
        // Predicated region
        $region17: #{tpu_custom_call.1} parent=11 // pred_check
          %p140 = pneg %p94
        $region18: #{tpu_custom_call.1} parent=11 // pred_check_branch
          %142 = sbr.rel (%p140) target = $region20
        $region19: #{tpu_custom_call.1} parent=11 // pred_region
          _
        $region20: #{tpu_custom_call.1} parent=11 // pred_fallthru
          _
      $region12: #{tpu_custom_call.1} parent=5 // pred_fallthru
        _
      %p143 = scmp.lt.s32.totalorder %s12, 2
      // Predicated region
      $region21: #{tpu_custom_call.1} parent=5 // pred_check
        %p144 = pneg %p143
      $region22: #{tpu_custom_call.1} parent=5 // pred_check_branch
        %146 = sbr.rel (%p144) target = $region24
      $region23: #{tpu_custom_call.1} parent=5 // pred_region
        // Predicated region
        $region25: #{tpu_custom_call.1} parent=23 // pred_check
          %p147 = pneg %p46
        $region26: #{tpu_custom_call.1} parent=23 // pred_check_branch
          %149 = sbr.rel (%p147) target = $region28
        $region27: #{tpu_custom_call.1} parent=23 // pred_region
          %s150 = smul.u32 16, %s20
          %p151 = scmp.lt.s32.totalorder %s19, 1
          %s152 = scalar_select %p151, %s19, 1
          %p153 = scmp.lt.s32.totalorder %s150, 15
          %s154 = scalar_select %p153, %s150, 15
          %s155 = smul.addr %s152, 16
          %s156 = sadd.s32 %s154, %s155
          %s157 = smul.addr %s156, 4
          %s158 = scalar_lea.vmem %s0, %s157
          %s159 = smul.u32 16, %s20
        $region28: #{tpu_custom_call.1} parent=23 // pred_fallthru
          _
      $region24: #{tpu_custom_call.1} parent=5 // pred_fallthru
        _
      %p160 = scmp.le.s32.totalorder 1, %s12
      %p161 = scmp.lt.s32.totalorder %s12, 3
      %p162 = pnand %p160, %p161
      %p163 = pneg %p162
      // Predicated region
      $region29: #{tpu_custom_call.1} parent=5 // pred_check
        _
      $region30: #{tpu_custom_call.1} parent=5 // pred_check_branch
        %165 = sbr.rel (%p162) target = $region32
      $region31: #{tpu_custom_call.1} parent=5 // pred_region
        %s166 = ssub.s32 %s12, 1
        %s167 = smul.u32 16, %s22
        %p168 = scmp.lt.s32.totalorder %s21, 1
        %s169 = scalar_select %p168, %s21, 1
        %p170 = scmp.lt.s32.totalorder %s167, 15
        %s171 = scalar_select %p170, %s167, 15
        %s172 = smul.addr %s169, 16
        %s173 = sadd.s32 %s171, %s172
        %s174 = smul.addr %s173, 4
        %s175 = scalar_lea.vmem %s0, %s174
        %p176 = pneg %p52
        %p177 = pneg %p49
        %p178 = pneg %p73
        %p179 = pneg %p70
        %p180 = pneg %p94
        %p181 = pneg %p91
        %p182 = pneg %p122
        %p183 = pneg %p119
        %s184 = sand.u32 %s109, 1
        %s185 = scalar_lea.sflag [#allocation3], %s184
        %s186 = sand.u32 %s109, 1
        %s187 = smul.addr %s186, 16
        %s188 = scalar_lea.vmem [#allocation2], %s187
        %s189 = smul.u32 16, %s22
        %p190 = scmp.lt.s32.totalorder %s21, 1
        %s191 = scalar_select %p190, %s21, 1
        %p192 = scmp.lt.s32.totalorder %s189, 15
        %s193 = scalar_select %p192, %s189, 15
        %s194 = smul.addr %s191, 16
        %s195 = sadd.s32 %s193, %s194
        %s196 = smul.addr %s195, 4
        %s197 = scalar_lea.vmem %s0, %s196
        %s198 = smul.u32 16, %s22
        %v200 = vld [vmem:[%s197] sm:$0xf]
        %v201 = vld [vmem:[%s197 + $0x4] sm:$0xf]
        %v202 = vld [vmem:[%s197 + $0x8] sm:$0xf]
        %v203 = vld [vmem:[%s197 + $0xc] sm:$0xf]
        %v204 = vld [vmem:[%s197 + $0x10] sm:$0xf]
        %v205 = vld [vmem:[%s197 + $0x14] sm:$0xf]
        %v206 = vld [vmem:[%s197 + $0x18] sm:$0xf]
        %v207 = vld [vmem:[%s197 + $0x1c] sm:$0xf]
        %v208 = vld [vmem:[%s197 + $0x20] sm:$0xf]
        %v209 = vld [vmem:[%s197 + $0x24] sm:$0xf]
        %v210 = vld [vmem:[%s197 + $0x28] sm:$0xf]
        %v211 = vld [vmem:[%s197 + $0x2c] sm:$0xf]
        %v212 = vld [vmem:[%s197 + $0x30] sm:$0xf]
        %v213 = vld [vmem:[%s197 + $0x34] sm:$0xf]
        %v214 = vld [vmem:[%s197 + $0x38] sm:$0xf]
        %v215 = vld [vmem:[%s197 + $0x3c] sm:$0xf]
        %v216 = vld [vmem:[%s1] sm:$0xf]
        %v217 = vld [vmem:[%s1 + $0x4] sm:$0xf]
        %v218 = vld [vmem:[%s1 + $0x8] sm:$0xf]
        %v219 = vld [vmem:[%s1 + $0xc] sm:$0xf]
        %v220 = vld [vmem:[%s1 + $0x10] sm:$0xf]
        %v221 = vld [vmem:[%s1 + $0x14] sm:$0xf]
        %v222 = vld [vmem:[%s1 + $0x18] sm:$0xf]
        %v223 = vld [vmem:[%s1 + $0x1c] sm:$0xf]
        %v240 = vunpack.c.l.b16 %v200
        %v241 = vunpack.c.l.b16 %v201
        %v242 = vunpack.c.l.b16 %v202
        %v243 = vunpack.c.l.b16 %v203
        %v244 = vunpack.c.l.b16 %v204
        %v245 = vunpack.c.l.b16 %v205
        %v246 = vunpack.c.l.b16 %v206
        %v247 = vunpack.c.l.b16 %v207
        %v248 = vunpack.c.l.b16 %v208
        %v249 = vunpack.c.l.b16 %v209
        %v250 = vunpack.c.l.b16 %v210
        %v251 = vunpack.c.l.b16 %v211
        %v252 = vunpack.c.l.b16 %v212
        %v253 = vunpack.c.l.b16 %v213
        %v254 = vunpack.c.l.b16 %v214
        %v255 = vunpack.c.l.b16 %v215
        %v256 = vpack.c.b16 %v241, %v240
        %v257 = vpack.c.b16 %v243, %v242
        %v258 = vpack.c.b16 %v245, %v244
        %v259 = vpack.c.b16 %v247, %v246
        %v260 = vpack.c.b16 %v249, %v248
        %v261 = vpack.c.b16 %v251, %v250
        %v262 = vpack.c.b16 %v253, %v252
        %v263 = vpack.c.b16 %v255, %v254
        %v272 = vunpack.c.l.b16 %v216
        %v273 = vunpack.c.l.b16 %v217
        %v274 = vunpack.c.l.b16 %v218
        %v275 = vunpack.c.l.b16 %v219
        %v276 = vunpack.c.l.b16 %v220
        %v277 = vunpack.c.l.b16 %v221
        %v278 = vunpack.c.l.b16 %v222
        %v279 = vunpack.c.l.b16 %v223
        %v280 = vpack.c.b16 %v273, %v272
        %v281 = vpack.c.b16 %v275, %v274
        %v282 = vpack.c.b16 %v277, %v276
        %v283 = vpack.c.b16 %v279, %v278
        %vm288 = vcmask 523264
        %v290 = vsel %vm288, %v256, 0
        %v293 = vsel %vm288, %v257, 0
        %v296 = vsel %vm288, %v258, 0
        %v299 = vsel %vm288, %v259, 0
        %v302 = vsel %vm288, %v260, 0
        %v305 = vsel %vm288, %v261, 0
        %v308 = vsel %vm288, %v262, 0
        %v311 = vsel %vm288, %v263, 0
        %313 = vmatprep.subr.bf16.mxu0 0
        %314 = vmatpush1.bf16.msra.mxu0 0
        %315 = vmatprep.subr.bf16.mxu0 0
        %316 = vmatpush1.bf16.msra.mxu0 0
        %317 = vmatprep.subr.bf16.mxu0 0
        %318 = vmatpush1.bf16.msra.mxu0 0
        %319 = vmatprep.subr.bf16.mxu0 0
        %320 = vmatpush1.bf16.msra.mxu0 0
        %321 = vmatprep.subr.bf16.mxu0 0
        %322 = vmatpush1.bf16.msra.mxu0 %v283
        %323 = vmatprep.subr.bf16.mxu0 0
        %324 = vmatpush1.bf16.msra.mxu0 %v282
        %325 = vmatprep.subr.bf16.mxu0 0
        %326 = vmatpush1.bf16.msra.mxu0 %v281
        %327 = vmatprep.subr.bf16.mxu0 0
        %328 = vmatpush1.bf16.msra.mxu0 %v280
        %329 = vmatprep.subr.bf16.mxu0 0
        %330 = vmatpush2.bf16.msra.mxu0 0
        %331 = vmatprep.subr.bf16.mxu0 0
        %332 = vmatpush2.bf16.msra.mxu0 0
        %333 = vmatprep.subr.bf16.mxu0 0
        %334 = vmatpush2.bf16.msra.mxu0 0
        %335 = vmatprep.subr.bf16.mxu0 0
        %336 = vmatpush2.bf16.msra.mxu0 0
        %337 = vmatprep.subr.bf16.mxu0 0
        %338 = vmatpush2.bf16.msra.mxu0 0
        %339 = vmatprep.subr.bf16.mxu0 0
        %340 = vmatpush2.bf16.msra.mxu0 0
        %341 = vmatprep.subr.bf16.mxu0 0
        %342 = vmatpush2.bf16.msra.mxu0 0
        %343 = vmatprep.subr.bf16.mxu0 0
        %344 = vmatpush2.bf16.msra.mxu0 0
        %345 = vmatprep.mubr.bf16.mxu0 0
        %346 = vmatmul.mubr.bf16.gmra.mxu0 %v290
        %v347 = vpop.f32.mrf.mxu0
        %v348 = vadd.f32 0.0, %v347
        %v349 = vpop.f32.mrf.mxu0
        %v350 = vpop.f32.mrf.mxu0
        %v351 = vadd.f32 0.0, %v350
        %v352 = vpop.f32.mrf.mxu0
        %353 = vmatprep.mubr.bf16.mxu0 0
        %354 = vmatmul.mubr.bf16.gmra.mxu0 %v293
        %v355 = vpop.f32.mrf.mxu0
        %v356 = vadd.f32 0.0, %v355
        %v357 = vpop.f32.mrf.mxu0
        %v358 = vpop.f32.mrf.mxu0
        %v359 = vadd.f32 0.0, %v358
        %v360 = vpop.f32.mrf.mxu0
        %361 = vmatprep.mubr.bf16.mxu0 0
        %362 = vmatmul.mubr.bf16.gmra.mxu0 %v296
        %v363 = vpop.f32.mrf.mxu0
        %v364 = vadd.f32 0.0, %v363
        %v365 = vpop.f32.mrf.mxu0
        %v366 = vpop.f32.mrf.mxu0
        %v367 = vadd.f32 0.0, %v366
        %v368 = vpop.f32.mrf.mxu0
        %369 = vmatprep.mubr.bf16.mxu0 0
        %370 = vmatmul.mubr.bf16.gmra.mxu0 %v299
        %v371 = vpop.f32.mrf.mxu0
        %v372 = vadd.f32 0.0, %v371
        %v373 = vpop.f32.mrf.mxu0
        %v374 = vpop.f32.mrf.mxu0
        %v375 = vadd.f32 0.0, %v374
        %v376 = vpop.f32.mrf.mxu0
        %377 = vmatprep.mubr.bf16.mxu0 0
        %378 = vmatmul.mubr.bf16.gmra.mxu0 %v302
        %v379 = vpop.f32.mrf.mxu0
        %v380 = vadd.f32 0.0, %v379
        %v381 = vpop.f32.mrf.mxu0
        %v382 = vpop.f32.mrf.mxu0
        %v383 = vadd.f32 0.0, %v382
        %v384 = vpop.f32.mrf.mxu0
        %385 = vmatprep.mubr.bf16.mxu0 0
        %386 = vmatmul.mubr.bf16.gmra.mxu0 %v305
        %v387 = vpop.f32.mrf.mxu0
        %v388 = vadd.f32 0.0, %v387
        %v389 = vpop.f32.mrf.mxu0
        %v390 = vpop.f32.mrf.mxu0
        %v391 = vadd.f32 0.0, %v390
        %v392 = vpop.f32.mrf.mxu0
        %393 = vmatprep.mubr.bf16.mxu0 0
        %394 = vmatmul.mubr.bf16.gmra.mxu0 %v308
        %v395 = vpop.f32.mrf.mxu0
        %v396 = vadd.f32 0.0, %v395
        %v397 = vpop.f32.mrf.mxu0
        %v398 = vpop.f32.mrf.mxu0
        %v399 = vadd.f32 0.0, %v398
        %v400 = vpop.f32.mrf.mxu0
        %401 = vmatprep.mubr.bf16.mxu0 0
        %402 = vmatmul.mubr.bf16.gmra.mxu0 %v311
        %v403 = vpop.f32.mrf.mxu0
        %v404 = vadd.f32 0.0, %v403
        %v405 = vpop.f32.mrf.mxu0
        %v406 = vpop.f32.mrf.mxu0
        %v407 = vadd.f32 0.0, %v406
        %v408 = vpop.f32.mrf.mxu0
        %409 = vdwg.mxu0
        %v410 = vmul.f32 %v348, %v348
        %v411 = vmul.f32 %v351, %v351
        %v412 = vmul.f32 %v356, %v356
        %v413 = vmul.f32 %v359, %v359
        %v414 = vmul.f32 %v364, %v364
        %v415 = vmul.f32 %v367, %v367
        %v416 = vmul.f32 %v372, %v372
        %v417 = vmul.f32 %v375, %v375
        %v418 = vmul.f32 %v380, %v380
        %v419 = vmul.f32 %v383, %v383
        %v420 = vmul.f32 %v388, %v388
        %v421 = vmul.f32 %v391, %v391
        %v422 = vmul.f32 %v396, %v396
        %v423 = vmul.f32 %v399, %v399
        %v424 = vmul.f32 %v404, %v404
        %v425 = vmul.f32 %v407, %v407
        %442 = vrot.lane.b32.xlu0 %v410, 64
        %v443 = vpop.permute.xlu0 %442
        %444 = vrot.lane.b32.xlu0 %v411, 64
        %v445 = vpop.permute.xlu0 %444
        %446 = vrot.lane.b32.xlu0 %v412, 64
        %v447 = vpop.permute.xlu0 %446
        %448 = vrot.lane.b32.xlu0 %v413, 64
        %v449 = vpop.permute.xlu0 %448
        %450 = vrot.lane.b32.xlu0 %v414, 64
        %v451 = vpop.permute.xlu0 %450
        %452 = vrot.lane.b32.xlu0 %v415, 64
        %v453 = vpop.permute.xlu0 %452
        %454 = vrot.lane.b32.xlu0 %v416, 64
        %v455 = vpop.permute.xlu0 %454
        %456 = vrot.lane.b32.xlu0 %v417, 64
        %v457 = vpop.permute.xlu0 %456
        %458 = vrot.lane.b32.xlu0 %v418, 64
        %v459 = vpop.permute.xlu0 %458
        %460 = vrot.lane.b32.xlu0 %v419, 64
        %v461 = vpop.permute.xlu0 %460
        %462 = vrot.lane.b32.xlu0 %v420, 64
        %v463 = vpop.permute.xlu0 %462
        %464 = vrot.lane.b32.xlu0 %v421, 64
        %v465 = vpop.permute.xlu0 %464
        %466 = vrot.lane.b32.xlu0 %v422, 64
        %v467 = vpop.permute.xlu0 %466
        %468 = vrot.lane.b32.xlu0 %v423, 64
        %v469 = vpop.permute.xlu0 %468
        %470 = vrot.lane.b32.xlu0 %v424, 64
        %v471 = vpop.permute.xlu0 %470
        %472 = vrot.lane.b32.xlu0 %v425, 64
        %v473 = vpop.permute.xlu0 %472
        %v490 = vadd.f32 %v410, %v443
        %v491 = vadd.f32 %v411, %v445
        %v492 = vadd.f32 %v412, %v447
        %v493 = vadd.f32 %v413, %v449
        %v494 = vadd.f32 %v414, %v451
        %v495 = vadd.f32 %v415, %v453
        %v496 = vadd.f32 %v416, %v455
        %v497 = vadd.f32 %v417, %v457
        %v498 = vadd.f32 %v418, %v459
        %v499 = vadd.f32 %v419, %v461
        %v500 = vadd.f32 %v420, %v463
        %v501 = vadd.f32 %v421, %v465
        %v502 = vadd.f32 %v422, %v467
        %v503 = vadd.f32 %v423, %v469
        %v504 = vadd.f32 %v424, %v471
        %v505 = vadd.f32 %v425, %v473
        %v506 = vrsqrt.pop %v490
        %v507 = vmul.f32 %v490, %v506
        %vm508 = vcmp.eq.f32.partialorder %v490, inf
        %v509 = vsel %vm508, %v490, %v507
        %vm510 = vcmp.eq.f32.partialorder %v490, 0.0
        %v511 = vand.u32 %v490, 2147483648
        %v512 = vsel %vm510, %v511, %v509
        %v513 = vrsqrt.pop %v491
        %v514 = vmul.f32 %v491, %v513
        %vm515 = vcmp.eq.f32.partialorder %v491, inf
        %v516 = vsel %vm515, %v491, %v514
        %vm517 = vcmp.eq.f32.partialorder %v491, 0.0
        %v518 = vand.u32 %v491, 2147483648
        %v519 = vsel %vm517, %v518, %v516
        %v520 = vrsqrt.pop %v492
        %v521 = vmul.f32 %v492, %v520
        %vm522 = vcmp.eq.f32.partialorder %v492, inf
        %v523 = vsel %vm522, %v492, %v521
        %vm524 = vcmp.eq.f32.partialorder %v492, 0.0
        %v525 = vand.u32 %v492, 2147483648
        %v526 = vsel %vm524, %v525, %v523
        %v527 = vrsqrt.pop %v493
        %v528 = vmul.f32 %v493, %v527
        %vm529 = vcmp.eq.f32.partialorder %v493, inf
        %v530 = vsel %vm529, %v493, %v528
        %vm531 = vcmp.eq.f32.partialorder %v493, 0.0
        %v532 = vand.u32 %v493, 2147483648
        %v533 = vsel %vm531, %v532, %v530
        %v534 = vrsqrt.pop %v494
        %v535 = vmul.f32 %v494, %v534
        %vm536 = vcmp.eq.f32.partialorder %v494, inf
        %v537 = vsel %vm536, %v494, %v535
        %vm538 = vcmp.eq.f32.partialorder %v494, 0.0
        %v539 = vand.u32 %v494, 2147483648
        %v540 = vsel %vm538, %v539, %v537
        %v541 = vrsqrt.pop %v495
        %v542 = vmul.f32 %v495, %v541
        %vm543 = vcmp.eq.f32.partialorder %v495, inf
        %v544 = vsel %vm543, %v495, %v542
        %vm545 = vcmp.eq.f32.partialorder %v495, 0.0
        %v546 = vand.u32 %v495, 2147483648
        %v547 = vsel %vm545, %v546, %v544
        %v548 = vrsqrt.pop %v496
        %v549 = vmul.f32 %v496, %v548
        %vm550 = vcmp.eq.f32.partialorder %v496, inf
        %v551 = vsel %vm550, %v496, %v549
        %vm552 = vcmp.eq.f32.partialorder %v496, 0.0
        %v553 = vand.u32 %v496, 2147483648
        %v554 = vsel %vm552, %v553, %v551
        %v555 = vrsqrt.pop %v497
        %v556 = vmul.f32 %v497, %v555
        %vm557 = vcmp.eq.f32.partialorder %v497, inf
        %v558 = vsel %vm557, %v497, %v556
        %vm559 = vcmp.eq.f32.partialorder %v497, 0.0
        %v560 = vand.u32 %v497, 2147483648
        %v561 = vsel %vm559, %v560, %v558
        %v562 = vrsqrt.pop %v498
        %v563 = vmul.f32 %v498, %v562
        %vm564 = vcmp.eq.f32.partialorder %v498, inf
        %v565 = vsel %vm564, %v498, %v563
        %vm566 = vcmp.eq.f32.partialorder %v498, 0.0
        %v567 = vand.u32 %v498, 2147483648
        %v568 = vsel %vm566, %v567, %v565
        %v569 = vrsqrt.pop %v499
        %v570 = vmul.f32 %v499, %v569
        %vm571 = vcmp.eq.f32.partialorder %v499, inf
        %v572 = vsel %vm571, %v499, %v570
        %vm573 = vcmp.eq.f32.partialorder %v499, 0.0
        %v574 = vand.u32 %v499, 2147483648
        %v575 = vsel %vm573, %v574, %v572
        %v576 = vrsqrt.pop %v500
        %v577 = vmul.f32 %v500, %v576
        %vm578 = vcmp.eq.f32.partialorder %v500, inf
        %v579 = vsel %vm578, %v500, %v577
        %vm580 = vcmp.eq.f32.partialorder %v500, 0.0
        %v581 = vand.u32 %v500, 2147483648
        %v582 = vsel %vm580, %v581, %v579
        %v583 = vrsqrt.pop %v501
        %v584 = vmul.f32 %v501, %v583
        %vm585 = vcmp.eq.f32.partialorder %v501, inf
        %v586 = vsel %vm585, %v501, %v584
        %vm587 = vcmp.eq.f32.partialorder %v501, 0.0
        %v588 = vand.u32 %v501, 2147483648
        %v589 = vsel %vm587, %v588, %v586
        %v590 = vrsqrt.pop %v502
        %v591 = vmul.f32 %v502, %v590
        %vm592 = vcmp.eq.f32.partialorder %v502, inf
        %v593 = vsel %vm592, %v502, %v591
        %vm594 = vcmp.eq.f32.partialorder %v502, 0.0
        %v595 = vand.u32 %v502, 2147483648
        %v596 = vsel %vm594, %v595, %v593
        %v597 = vrsqrt.pop %v503
        %v598 = vmul.f32 %v503, %v597
        %vm599 = vcmp.eq.f32.partialorder %v503, inf
        %v600 = vsel %vm599, %v503, %v598
        %vm601 = vcmp.eq.f32.partialorder %v503, 0.0
        %v602 = vand.u32 %v503, 2147483648
        %v603 = vsel %vm601, %v602, %v600
        %v604 = vrsqrt.pop %v504
        %v605 = vmul.f32 %v504, %v604
        %vm606 = vcmp.eq.f32.partialorder %v504, inf
        %v607 = vsel %vm606, %v504, %v605
        %vm608 = vcmp.eq.f32.partialorder %v504, 0.0
        %v609 = vand.u32 %v504, 2147483648
        %v610 = vsel %vm608, %v609, %v607
        %v611 = vrsqrt.pop %v505
        %v612 = vmul.f32 %v505, %v611
        %vm613 = vcmp.eq.f32.partialorder %v505, inf
        %v614 = vsel %vm613, %v505, %v612
        %vm615 = vcmp.eq.f32.partialorder %v505, 0.0
        %v616 = vand.u32 %v505, 2147483648
        %v617 = vsel %vm615, %v616, %v614
        %v618 = vld [vmem:[%s2] sm:$0xff]
        %v619 = vld [vmem:[%s2 + $0x8] sm:$0xff]
        %v621 = vsel %vm288, %v618, 0
        %v624 = vsel %vm288, %v619, 0
        %v627 = vsel %vm288, %v512, 0
        %v630 = vsel %vm288, %v519, 0
        %v633 = vsel %vm288, %v526, 0
        %v636 = vsel %vm288, %v533, 0
        %v639 = vsel %vm288, %v540, 0
        %v642 = vsel %vm288, %v547, 0
        %v645 = vsel %vm288, %v554, 0
        %v648 = vsel %vm288, %v561, 0
        %v651 = vsel %vm288, %v568, 0
        %v654 = vsel %vm288, %v575, 0
        %v657 = vsel %vm288, %v582, 0
        %v660 = vsel %vm288, %v589, 0
        %v663 = vsel %vm288, %v596, 0
        %v666 = vsel %vm288, %v603, 0
        %v669 = vsel %vm288, %v610, 0
        %v672 = vsel %vm288, %v617, 0
        %674 = vmatprep.subr.mxu0 0.0
        %675 = vmatpush1.xpose.msra.mxu0 %v672
        %676 = vmatprep.subr.mxu0 0.0
        %677 = vmatpush1.xpose.msra.mxu0 %v669
        %678 = vmatprep.subr.mxu0 0.0
        %679 = vmatpush1.xpose.msra.mxu0 %v666
        %680 = vmatprep.subr.mxu0 0.0
        %681 = vmatpush1.xpose.msra.mxu0 %v663
        %682 = vmatprep.subr.mxu0 0.0
        %683 = vmatpush1.xpose.msra.mxu0 %v660
        %684 = vmatprep.subr.mxu0 0.0
        %685 = vmatpush1.xpose.msra.mxu0 %v657
        %686 = vmatprep.subr.mxu0 0.0
        %687 = vmatpush1.xpose.msra.mxu0 %v654
        %688 = vmatprep.subr.mxu0 0.0
        %689 = vmatpush1.xpose.msra.mxu0 %v651
        %690 = vmatprep.subr.mxu0 0.0
        %691 = vmatpush1.xpose.msra.mxu0 %v648
        %692 = vmatprep.subr.mxu0 0.0
        %693 = vmatpush1.xpose.msra.mxu0 %v645
        %694 = vmatprep.subr.mxu0 0.0
        %695 = vmatpush1.xpose.msra.mxu0 %v642
        %696 = vmatprep.subr.mxu0 0.0
        %697 = vmatpush1.xpose.msra.mxu0 %v639
        %698 = vmatprep.subr.mxu0 0.0
        %699 = vmatpush1.xpose.msra.mxu0 %v636
        %700 = vmatprep.subr.mxu0 0.0
        %701 = vmatpush1.xpose.msra.mxu0 %v633
        %702 = vmatprep.subr.mxu0 0.0
        %703 = vmatpush1.xpose.msra.mxu0 %v630
        %704 = vmatprep.subr.mxu0 0.0
        %705 = vmatpush1.xpose.msra.mxu0 %v627
        %706 = vmatprep.subr.mxu0 0.0
        %707 = vmatpush2.xpose.msra.mxu0 0.0
        %708 = vmatprep.subr.mxu0 0.0
        %709 = vmatpush2.xpose.msra.mxu0 0.0
        %710 = vmatprep.subr.mxu0 0.0
        %711 = vmatpush2.xpose.msra.mxu0 0.0
        %712 = vmatprep.subr.mxu0 0.0
        %713 = vmatpush2.xpose.msra.mxu0 0.0
        %714 = vmatprep.subr.mxu0 0.0
        %715 = vmatpush2.xpose.msra.mxu0 0.0
        %716 = vmatprep.subr.mxu0 0.0
        %717 = vmatpush2.xpose.msra.mxu0 0.0
        %718 = vmatprep.subr.mxu0 0.0
        %719 = vmatpush2.xpose.msra.mxu0 0.0
        %720 = vmatprep.subr.mxu0 0.0
        %721 = vmatpush2.xpose.msra.mxu0 0.0
        %722 = vmatprep.subr.mxu0 0.0
        %723 = vmatpush2.xpose.msra.mxu0 0.0
        %724 = vmatprep.subr.mxu0 0.0
        %725 = vmatpush2.xpose.msra.mxu0 0.0
        %726 = vmatprep.subr.mxu0 0.0
        %727 = vmatpush2.xpose.msra.mxu0 0.0
        %728 = vmatprep.subr.mxu0 0.0
        %729 = vmatpush2.xpose.msra.mxu0 0.0
        %730 = vmatprep.subr.mxu0 0.0
        %731 = vmatpush2.xpose.msra.mxu0 0.0
        %732 = vmatprep.subr.mxu0 0.0
        %733 = vmatpush2.xpose.msra.mxu0 0.0
        %734 = vmatprep.subr.mxu0 0.0
        %735 = vmatpush2.xpose.msra.mxu0 0.0
        %736 = vmatprep.subr.mxu0 0.0
        %737 = vmatpush2.xpose.msra.mxu0 0.0
        %738 = vmatprep.mubr.f32.mxu0 0.0
        %739 = vmatmul.mubr.f32.gmra.mxu0 %v621
        %v740 = vpop.f32.mrf.mxu0
        %v741 = vadd.f32 0.0, %v740
        %v742 = vpop.f32.mrf.mxu0
        %743 = vmatprep.mubr.f32.mxu0 0.0
        %744 = vmatmul.mubr.f32.gmra.mxu0 %v624
        %v745 = vpop.f32.mrf.mxu0
        %v746 = vadd.f32 0.0, %v745
        %v747 = vpop.f32.mrf.mxu0
        %748 = vdwg.mxu0
        %v749 = vmax.f32 %v741, 1e-07
        %v750 = vmax.f32 %v746, 1e-07
        %v751 = vlog2.pop %v749
        %v752 = vmul.f32 %v751, 0.6931472
        %v753 = vlog2.pop %v750
        %v754 = vmul.f32 %v753, 0.6931472
        %755 = vst [vmem:[%s188] sm:$0xff] %v752
        %756 = vst [vmem:[%s188 + $0x8] sm:$0xff] %v754
        %s757 = sand.u32 %s109, 1
        %s758 = scalar_lea.sflag [#allocation3], %s757
        %s759 = sand.u32 %s109, 1
        %s760 = smul.addr %s759, 16
        %s761 = scalar_lea.vmem [#allocation2], %s760
        // Predicated region
        $region33: #{tpu_custom_call.1} parent=31 // pred_check
          %p762 = pneg %p119
        $region34: #{tpu_custom_call.1} parent=31 // pred_check_branch
          %764 = sbr.rel (%p762) target = $region36
        $region35: #{tpu_custom_call.1} parent=31 // pred_region
          %s766 = ssub.s32 256, 256
          %767 = vsyncadd %s758, %s766
          %s768 = smul.addr %s21, 2
          %s769 = sadd.s32 %s22, %s768
          %s770 = smul.addr %s769, 128
          %s771 = scalar_lea.hbm %s3, %s770
          %s772 = sshll.u32 %s761, 4
          %s773 = int_to_ptr.vmem [resolvable:$true] %s772
          %778 = dma.vmem_to_hbm [thread:$0]  %s773, 256, %s771, %s758, 128, 128, 8
        $region36: #{tpu_custom_call.1} parent=31 // pred_fallthru
          _
      $region32: #{tpu_custom_call.1} parent=5 // pred_fallthru
        _
      %p779 = scmp.le.s32.totalorder 2, %s12
      // Predicated region
      $region37: #{tpu_custom_call.1} parent=5 // pred_check
        %p780 = pneg %p779
      $region38: #{tpu_custom_call.1} parent=5 // pred_check_branch
        %782 = sbr.rel (%p780) target = $region40
      $region39: #{tpu_custom_call.1} parent=5 // pred_region
        %s783 = ssub.s32 %s12, 2
        // Predicated region
        $region41: #{tpu_custom_call.1} parent=39 // pred_check
          %p784 = pneg %p125
        $region42: #{tpu_custom_call.1} parent=39 // pred_check_branch
          %786 = sbr.rel (%p784) target = $region44
        $region43: #{tpu_custom_call.1} parent=39 // pred_region
          %s787 = sand.u32 %s110, 1
          %s788 = scalar_lea.sflag [#allocation3], %s787
          %s789 = sand.u32 %s110, 1
          %s790 = smul.addr %s789, 16
          %s791 = scalar_lea.vmem [#allocation2], %s790
          %792 = dma.done %s788, 256
        $region44: #{tpu_custom_call.1} parent=39 // pred_fallthru
          _
      $region40: #{tpu_custom_call.1} parent=5 // pred_fallthru
        _
    $region6: #{tpu_custom_call.1} parent=1 // loop_footer
      %s16 = sadd.s32 1, %s12
    $region7: #{tpu_custom_call.1} parent=1 // loop_footer_branch
      %11 = sbr.rel target = $region3
    $region8: #{tpu_custom_call.1} parent=1 // loop_exit
      _
    %793 = vsyncpa [#allocation3], 1
    %s794 = scalar_lea.sflag [#allocation3], 1
    %795 = vsyncpa %s794, 1

</llo_original>
